<compile_context>
chip_gen: v5e
topology: v5e:2x2
jax: 0.10.0
libtpu: 0.0.40
codegen_flags: <defaults>
</compile_context>

<pallas_src>
import functools

import jax
import jax.numpy as jnp
from jax.experimental import pallas as pl
from jax.experimental.pallas import tpu as pltpu


def basic_block_kernel(xp_ref, w1_ref, s1_ref, b1_ref,
                       w2_ref, s2_ref, b2_ref, o_ref, *, H, W, C):
    # xp_ref : (N, H+2, (W+2)*C)  act dtype  zero-padded input, (W, C) folded lane-dense
    # w*_ref : (3, (W+2)*C, W*C)  mxu dtype  block-Toeplitz conv weights, one per dy
    # s*,b*  : (1, W*C)           f32        folded BN scale/bias, tiled across W
    # o_ref  : (N, H, W*C)                   output (lane-dense, unmasked store)
    N = xp_ref.shape[0]
    Hp, Wp = H + 2, W + 2
    WC, WpC = W * C, Wp * C
    NH = N * H
    mxu = w1_ref.dtype

    xp = xp_ref[...]                                   # (N, Hp, WpC)

    def conv(img, w_ref):
        # img: (N, Hp, WpC) in mxu dtype.  Lane-dense conv: dx shifts are folded
        # into the block-Toeplitz weight; accumulate the 3 dy bands in f32.
        acc = jnp.zeros((NH, WC), jnp.float32)
        for dy in range(3):
            band = img[:, dy:dy + H, :].reshape(NH, WpC)          # (NH, WpC)
            acc = acc + jnp.dot(band, w_ref[dy],
                                preferred_element_type=jnp.float32)
        return acc                                                 # (NH, WC) f32

    # ---- conv1 (3x3, s=1, p=1, no bias) + BN1 + ReLU ----
    y1 = conv(xp.astype(mxu), w1_ref)
    y1 = jnp.maximum(y1 * s1_ref[...] + b1_ref[...], 0.0)         # f32

    # ---- spatially pad conv1 output as a value (cast BEFORE the relayout) ----
    y1b = y1.astype(mxu).reshape(N, H, WC)
    zc = jnp.zeros((N, H, C), mxu)
    zr = jnp.zeros((N, 1, WpC), mxu)
    midp = jnp.concatenate(
        [zr, jnp.concatenate([zc, y1b, zc], axis=2), zr], axis=1)  # (N, Hp, WpC)

    # ---- conv2 (3x3, s=1, p=1, no bias) + BN2 ----
    y2 = conv(midp, w2_ref) * s2_ref[...] + b2_ref[...]            # (NH, WC) f32

    # ---- residual from the interior of the padded input (no extra DMA) ----
    res = xp[:, 1:1 + H, C:C + WC].reshape(NH, WC).astype(jnp.float32)
    out = jnp.maximum(y2 + res, 0.0)                               # final ReLU
    o_ref[...] = out.reshape(N, H, WC).astype(o_ref.dtype)         # lane-dense store


def basic_block_forward(x_nchw, w1, bn1, w2, bn2, eps=1e-5,
                        mxu_dtype=jnp.bfloat16):
    """BasicBlock forward (stride=1, downsample=None).  x_nchw: (N, C, H, W)."""
    N, C, H, W = x_nchw.shape
    Hp, Wp = H + 2, W + 2
    WC, WpC = W * C, Wp * C

    # NCHW -> NHWC -> spatial pad 1 -> fold (W, C) into one lane-dense dim.
    # Ship activations at the MXU dtype (halves the activation DMA in the bf16
    # path); element-wise math is done in f32 inside the kernel.
    x = jnp.transpose(x_nchw, (0, 2, 3, 1))
    xp = jnp.pad(x, ((0, 0), (1, 1), (1, 1), (0, 0)))
    xp_flat = xp.reshape(N, Hp, WpC).astype(mxu_dtype)

    def prep_w(w):
        # PyTorch (Cout, Cin, 3, 3) -> block-Toeplitz (3, Wp*C, W*C):
        #   T[dy, (wo+dx)*C + cin, wo*C + cout] = w[cout, cin, dy, dx]
        wk = jnp.transpose(w, (2, 3, 1, 0))                # (3, 3, Cin, Cout)
        wi = jnp.arange(Wp)
        wo = jnp.arange(W)
        dx = wi[:, None] - wo[None, :]                     # (Wp, W)
        valid = (dx >= 0) & (dx <= 2)
        blocks = wk[:, jnp.clip(dx, 0, 2)]                 # (3, Wp, W, Cin, Cout)
        blocks = jnp.where(valid[None, :, :, None, None], blocks, 0.0)
        T = jnp.transpose(blocks, (0, 1, 3, 2, 4)).reshape(3, WpC, WC)
        return T.astype(mxu_dtype)

    def prep_bn(bn):
        g, b, m, v = bn
        s = g / jnp.sqrt(v + eps)
        bias = b - m * s
        # Tile per-channel vectors across W so they broadcast over the
        # lane-dense (NH, W*C) in-kernel layout.
        return (jnp.tile(s, W).reshape(1, WC).astype(jnp.float32),
                jnp.tile(bias, W).reshape(1, WC).astype(jnp.float32))

    w1_k, w2_k = prep_w(w1), prep_w(w2)
    s1, b1 = prep_bn(bn1)
    s2, b2 = prep_bn(bn2)

    kernel = functools.partial(basic_block_kernel, H=H, W=W, C=C)

    out_flat = pl.pallas_call(
        kernel,
        out_shape=jax.ShapeDtypeStruct((N, H, WC), x_nchw.dtype),
        grid_spec=pltpu.PrefetchScalarGridSpec(
            num_scalar_prefetch=0,
            grid=(1,),                        # whole batch folded into matmul M
            in_specs=[
                pl.BlockSpec((N, Hp, WpC), lambda i: (0, 0, 0)),
                pl.BlockSpec((3, WpC, WC), lambda i: (0, 0, 0)),
                pl.BlockSpec((1, WC), lambda i: (0, 0)),
                pl.BlockSpec((1, WC), lambda i: (0, 0)),
                pl.BlockSpec((3, WpC, WC), lambda i: (0, 0, 0)),
                pl.BlockSpec((1, WC), lambda i: (0, 0)),
                pl.BlockSpec((1, WC), lambda i: (0, 0)),
            ],
            out_specs=pl.BlockSpec((N, H, WC), lambda i: (0, 0, 0)),
        ),
        compiler_params=pltpu.CompilerParams(
            dimension_semantics=("arbitrary",)),
    )(xp_flat, w1_k, s1, b1, w2_k, s2, b2)

    # (N, H, W*C) -> (N, H, W, C) -> NCHW
    return jnp.transpose(out_flat.reshape(N, H, W, C), (0, 3, 1, 2))


# ---------------------- pure-JAX reference (for checking) ----------------------
def basic_block_reference(x, w1, bn1, w2, bn2, eps=1e-5):
    def conv(a, w):
        return jax.lax.conv_general_dilated(
            a, w, window_strides=(1, 1), padding=((1, 1), (1, 1)),
            dimension_numbers=("NCHW", "OIHW", "NCHW"))

    def bn(a, p):
        g, b, m, v = p
        return ((a - m[None, :, None, None]) / jnp.sqrt(v[None, :, None, None] + eps)
                * g[None, :, None, None] + b[None, :, None, None])

    out = jax.nn.relu(bn(conv(x, w1), bn1))
    out = bn(conv(out, w2), bn2)
    return jax.nn.relu(out + x)


if __name__ == "__main__":
    # BasicBlock(inplanes=8, planes=8, stride=1, downsample=None)
    N, C, H, W = 2, 8, 16, 16   # W*C = 128 -> fully lane-dense in-kernel layout

    key = jax.random.PRNGKey(0)
    kx, kw1, kw2, kg1, kb1, kg2, kb2 = jax.random.split(key, 7)

    x = jax.random.normal(kx, (N, C, H, W), jnp.float32)

    # conv weights (Cout, Cin, 3, 3), no bias
    w1 = jax.random.normal(kw1, (C, C, 3, 3), jnp.float32) * 0.1
    w2 = jax.random.normal(kw2, (C, C, 3, 3), jnp.float32) * 0.1

    # BatchNorm params: (gamma, beta, running_mean, running_var)
    bn1 = (1.0 + 0.1 * jax.random.normal(kg1, (C,), jnp.float32),
           0.1 * jax.random.normal(kb1, (C,), jnp.float32),
           0.05 * jnp.arange(C, dtype=jnp.float32),
           1.0 + 0.01 * jnp.arange(C, dtype=jnp.float32))
    bn2 = (1.0 + 0.1 * jax.random.normal(kg2, (C,), jnp.float32),
           0.1 * jax.random.normal(kb2, (C,), jnp.float32),
           -0.05 * jnp.arange(C, dtype=jnp.float32),
           1.0 + 0.02 * jnp.arange(C, dtype=jnp.float32))

    ref = jax.block_until_ready(basic_block_reference(x, w1, bn1, w2, bn2))

    # Exact-math check: f32 activations and MXU operands, tight tolerance.
    out_f32 = jax.block_until_ready(
        basic_block_forward(x, w1, bn1, w2, bn2, mxu_dtype=jnp.float32))
    assert out_f32.shape == (N, C, H, W), out_f32.shape
    assert jnp.allclose(out_f32, ref, rtol=1e-4, atol=1e-4), (
        float(jnp.max(jnp.abs(out_f32 - ref))))

    # Optimized path: bf16 activations/weights on the MXU, f32 accumulate and
    # f32 element-wise BN/ReLU/residual math.
    out_bf16 = jax.block_until_ready(basic_block_forward(x, w1, bn1, w2, bn2))
    assert out_bf16.shape == (N, C, H, W), out_bf16.shape
    assert jnp.allclose(out_bf16, ref, rtol=5e-2, atol=5e-2), (
        float(jnp.max(jnp.abs(out_bf16 - ref))))

    print("KERNEL_OK")
</pallas_src>

<mosaic_0001>
module attributes {stable_mosaic.version = 11 : i64} {
  func.func @basic_block_kernel(%arg0: i32, %arg1: memref<2x18x144xf32, #tpu.memory_space<vmem>>, %arg2: memref<3x144x128xf32, #tpu.memory_space<vmem>>, %arg3: memref<1x128xf32, #tpu.memory_space<vmem>>, %arg4: memref<1x128xf32, #tpu.memory_space<vmem>>, %arg5: memref<3x144x128xf32, #tpu.memory_space<vmem>>, %arg6: memref<1x128xf32, #tpu.memory_space<vmem>>, %arg7: memref<1x128xf32, #tpu.memory_space<vmem>>, %arg8: memref<2x16x128xf32, #tpu.memory_space<vmem>>) attributes {dimension_semantics = [#tpu.dimension_semantics<arbitrary>], iteration_bounds = array<i64: 1>, scalar_prefetch = 0 : i64, scratch_operands = 0 : i64, tpu.core_type = #tpu.core_type<tc>, window_params = [{pipeline_mode = #tpu.pipeline_mode<synchronous>, transform_indices = @transform_0, window_bounds = array<i64: 2, 18, 144>}, {pipeline_mode = #tpu.pipeline_mode<synchronous>, transform_indices = @transform_1, window_bounds = array<i64: 3, 144, 128>}, {pipeline_mode = #tpu.pipeline_mode<synchronous>, transform_indices = @transform_2, window_bounds = array<i64: 1, 128>}, {pipeline_mode = #tpu.pipeline_mode<synchronous>, transform_indices = @transform_3, window_bounds = array<i64: 1, 128>}, {pipeline_mode = #tpu.pipeline_mode<synchronous>, transform_indices = @transform_4, window_bounds = array<i64: 3, 144, 128>}, {pipeline_mode = #tpu.pipeline_mode<synchronous>, transform_indices = @transform_5, window_bounds = array<i64: 1, 128>}, {pipeline_mode = #tpu.pipeline_mode<synchronous>, transform_indices = @transform_6, window_bounds = array<i64: 1, 128>}, {pipeline_mode = #tpu.pipeline_mode<synchronous>, transform_indices = @transform_7, window_bounds = array<i64: 2, 16, 128>}]} {
    %c0 = arith.constant 0 : index
    %c0_0 = arith.constant 0 : index
    %c0_1 = arith.constant 0 : index
    %0 = vector.load %arg1[%c0, %c0_0, %c0_1] : memref<2x18x144xf32, #tpu.memory_space<vmem>>, vector<2x18x144xf32>
    %cst = arith.constant 0.000000e+00 : f32
    %1 = vector.broadcast %cst : f32 to vector<32x128xf32>
    %2 = vector.extract_strided_slice %0 {offsets = [0, 0, 0], sizes = [2, 16, 144], strides = [1, 1, 1]} : vector<2x18x144xf32> to vector<2x16x144xf32>
    %3 = vector.shape_cast %2 : vector<2x16x144xf32> to vector<32x144xf32>
    %c0_2 = arith.constant 0 : index
    %c0_3 = arith.constant 0 : index
    %c0_4 = arith.constant 0 : index
    %4 = vector.load %arg2[%c0_2, %c0_3, %c0_4] : memref<3x144x128xf32, #tpu.memory_space<vmem>>, vector<1x144x128xf32>
    %5 = vector.shape_cast %4 : vector<1x144x128xf32> to vector<144x128xf32>
    %cst_5 = arith.constant dense<0.000000e+00> : vector<32x128xf32>
    %6 = tpu.matmul %3, %5, %cst_5 {dimension_numbers = #tpu.dot_dimension_numbers<[1], [0], [0], [1], [0, 0, 1, 1], [], []>} : vector<32x144xf32>, vector<144x128xf32>, vector<32x128xf32> -> vector<32x128xf32>
    %7 = arith.addf %1, %6 : vector<32x128xf32>
    %8 = vector.extract_strided_slice %0 {offsets = [0, 1, 0], sizes = [2, 16, 144], strides = [1, 1, 1]} : vector<2x18x144xf32> to vector<2x16x144xf32>
    %9 = vector.shape_cast %8 : vector<2x16x144xf32> to vector<32x144xf32>
    %c1 = arith.constant 1 : index
    %c0_6 = arith.constant 0 : index
    %c0_7 = arith.constant 0 : index
    %10 = vector.load %arg2[%c1, %c0_6, %c0_7] : memref<3x144x128xf32, #tpu.memory_space<vmem>>, vector<1x144x128xf32>
    %11 = vector.shape_cast %10 : vector<1x144x128xf32> to vector<144x128xf32>
    %cst_8 = arith.constant dense<0.000000e+00> : vector<32x128xf32>
    %12 = tpu.matmul %9, %11, %cst_8 {dimension_numbers = #tpu.dot_dimension_numbers<[1], [0], [0], [1], [0, 0, 1, 1], [], []>} : vector<32x144xf32>, vector<144x128xf32>, vector<32x128xf32> -> vector<32x128xf32>
    %13 = arith.addf %7, %12 : vector<32x128xf32>
    %14 = vector.extract_strided_slice %0 {offsets = [0, 2, 0], sizes = [2, 16, 144], strides = [1, 1, 1]} : vector<2x18x144xf32> to vector<2x16x144xf32>
    %15 = vector.shape_cast %14 : vector<2x16x144xf32> to vector<32x144xf32>
    %c2 = arith.constant 2 : index
    %c0_9 = arith.constant 0 : index
    %c0_10 = arith.constant 0 : index
    %16 = vector.load %arg2[%c2, %c0_9, %c0_10] : memref<3x144x128xf32, #tpu.memory_space<vmem>>, vector<1x144x128xf32>
    %17 = vector.shape_cast %16 : vector<1x144x128xf32> to vector<144x128xf32>
    %cst_11 = arith.constant dense<0.000000e+00> : vector<32x128xf32>
    %18 = tpu.matmul %15, %17, %cst_11 {dimension_numbers = #tpu.dot_dimension_numbers<[1], [0], [0], [1], [0, 0, 1, 1], [], []>} : vector<32x144xf32>, vector<144x128xf32>, vector<32x128xf32> -> vector<32x128xf32>
    %19 = arith.addf %13, %18 : vector<32x128xf32>
    %c0_12 = arith.constant 0 : index
    %c0_13 = arith.constant 0 : index
    %20 = vector.load %arg3[%c0_12, %c0_13] : memref<1x128xf32, #tpu.memory_space<vmem>>, vector<1x128xf32>
    %21 = vector.broadcast %20 : vector<1x128xf32> to vector<32x128xf32>
    %22 = arith.mulf %19, %21 : vector<32x128xf32>
    %c0_14 = arith.constant 0 : index
    %c0_15 = arith.constant 0 : index
    %23 = vector.load %arg4[%c0_14, %c0_15] : memref<1x128xf32, #tpu.memory_space<vmem>>, vector<1x128xf32>
    %24 = vector.broadcast %23 : vector<1x128xf32> to vector<32x128xf32>
    %25 = arith.addf %22, %24 : vector<32x128xf32>
    %cst_16 = arith.constant 0.000000e+00 : f32
    %26 = vector.broadcast %cst_16 : f32 to vector<32x128xf32>
    %27 = arith.maximumf %25, %26 : vector<32x128xf32>
    %28 = vector.shape_cast %27 : vector<32x128xf32> to vector<2x16x128xf32>
    %cst_17 = arith.constant 0.000000e+00 : f32
    %29 = vector.broadcast %cst_17 : f32 to vector<2x16x8xf32>
    %cst_18 = arith.constant 0.000000e+00 : f32
    %30 = vector.broadcast %cst_18 : f32 to vector<2x1x144xf32>
    %31 = tpu.concatenate %29, %28, %29 in 2 : vector<2x16x8xf32>, vector<2x16x128xf32>, vector<2x16x8xf32> -> vector<2x16x144xf32>
    %32 = tpu.concatenate %30, %31, %30 in 1 : vector<2x1x144xf32>, vector<2x16x144xf32>, vector<2x1x144xf32> -> vector<2x18x144xf32>
    %cst_19 = arith.constant 0.000000e+00 : f32
    %33 = vector.broadcast %cst_19 : f32 to vector<32x128xf32>
    %34 = vector.extract_strided_slice %32 {offsets = [0, 0, 0], sizes = [2, 16, 144], strides = [1, 1, 1]} : vector<2x18x144xf32> to vector<2x16x144xf32>
    %35 = vector.shape_cast %34 : vector<2x16x144xf32> to vector<32x144xf32>
    %c0_20 = arith.constant 0 : index
    %c0_21 = arith.constant 0 : index
    %c0_22 = arith.constant 0 : index
    %36 = vector.load %arg5[%c0_20, %c0_21, %c0_22] : memref<3x144x128xf32, #tpu.memory_space<vmem>>, vector<1x144x128xf32>
    %37 = vector.shape_cast %36 : vector<1x144x128xf32> to vector<144x128xf32>
    %cst_23 = arith.constant dense<0.000000e+00> : vector<32x128xf32>
    %38 = tpu.matmul %35, %37, %cst_23 {dimension_numbers = #tpu.dot_dimension_numbers<[1], [0], [0], [1], [0, 0, 1, 1], [], []>} : vector<32x144xf32>, vector<144x128xf32>, vector<32x128xf32> -> vector<32x128xf32>
    %39 = arith.addf %33, %38 : vector<32x128xf32>
    %40 = vector.extract_strided_slice %32 {offsets = [0, 1, 0], sizes = [2, 16, 144], strides = [1, 1, 1]} : vector<2x18x144xf32> to vector<2x16x144xf32>
    %41 = vector.shape_cast %40 : vector<2x16x144xf32> to vector<32x144xf32>
    %c1_24 = arith.constant 1 : index
    %c0_25 = arith.constant 0 : index
    %c0_26 = arith.constant 0 : index
    %42 = vector.load %arg5[%c1_24, %c0_25, %c0_26] : memref<3x144x128xf32, #tpu.memory_space<vmem>>, vector<1x144x128xf32>
    %43 = vector.shape_cast %42 : vector<1x144x128xf32> to vector<144x128xf32>
    %cst_27 = arith.constant dense<0.000000e+00> : vector<32x128xf32>
    %44 = tpu.matmul %41, %43, %cst_27 {dimension_numbers = #tpu.dot_dimension_numbers<[1], [0], [0], [1], [0, 0, 1, 1], [], []>} : vector<32x144xf32>, vector<144x128xf32>, vector<32x128xf32> -> vector<32x128xf32>
    %45 = arith.addf %39, %44 : vector<32x128xf32>
    %46 = vector.extract_strided_slice %32 {offsets = [0, 2, 0], sizes = [2, 16, 144], strides = [1, 1, 1]} : vector<2x18x144xf32> to vector<2x16x144xf32>
    %47 = vector.shape_cast %46 : vector<2x16x144xf32> to vector<32x144xf32>
    %c2_28 = arith.constant 2 : index
    %c0_29 = arith.constant 0 : index
    %c0_30 = arith.constant 0 : index
    %48 = vector.load %arg5[%c2_28, %c0_29, %c0_30] : memref<3x144x128xf32, #tpu.memory_space<vmem>>, vector<1x144x128xf32>
    %49 = vector.shape_cast %48 : vector<1x144x128xf32> to vector<144x128xf32>
    %cst_31 = arith.constant dense<0.000000e+00> : vector<32x128xf32>
    %50 = tpu.matmul %47, %49, %cst_31 {dimension_numbers = #tpu.dot_dimension_numbers<[1], [0], [0], [1], [0, 0, 1, 1], [], []>} : vector<32x144xf32>, vector<144x128xf32>, vector<32x128xf32> -> vector<32x128xf32>
    %51 = arith.addf %45, %50 : vector<32x128xf32>
    %c0_32 = arith.constant 0 : index
    %c0_33 = arith.constant 0 : index
    %52 = vector.load %arg6[%c0_32, %c0_33] : memref<1x128xf32, #tpu.memory_space<vmem>>, vector<1x128xf32>
    %53 = vector.broadcast %52 : vector<1x128xf32> to vector<32x128xf32>
    %54 = arith.mulf %51, %53 : vector<32x128xf32>
    %c0_34 = arith.constant 0 : index
    %c0_35 = arith.constant 0 : index
    %55 = vector.load %arg7[%c0_34, %c0_35] : memref<1x128xf32, #tpu.memory_space<vmem>>, vector<1x128xf32>
    %56 = vector.broadcast %55 : vector<1x128xf32> to vector<32x128xf32>
    %57 = arith.addf %54, %56 : vector<32x128xf32>
    %58 = vector.extract_strided_slice %0 {offsets = [0, 1, 8], sizes = [2, 16, 128], strides = [1, 1, 1]} : vector<2x18x144xf32> to vector<2x16x128xf32>
    %59 = vector.shape_cast %58 : vector<2x16x128xf32> to vector<32x128xf32>
    %60 = arith.addf %57, %59 : vector<32x128xf32>
    %cst_36 = arith.constant 0.000000e+00 : f32
    %61 = vector.broadcast %cst_36 : f32 to vector<32x128xf32>
    %62 = arith.maximumf %60, %61 : vector<32x128xf32>
    %63 = vector.shape_cast %62 : vector<32x128xf32> to vector<2x16x128xf32>
    %c0_37 = arith.constant 0 : index
    %c0_38 = arith.constant 0 : index
    %c0_39 = arith.constant 0 : index
    %64 = vector.load %arg8[%c0_37, %c0_38, %c0_39] : memref<2x16x128xf32, #tpu.memory_space<vmem>>, vector<2x16x128xf32>
    tpu.vector_store %arg8[%c0_37, %c0_38, %c0_39], %63 {strides = array<i32>} : memref<2x16x128xf32, #tpu.memory_space<vmem>>, vector<2x16x128xf32>,
    return
  }
  func.func @transform_0(%arg0: i32) -> (i32, i32, i32) {
    %c0_i32 = arith.constant 0 : i32
    %c0_i32_0 = arith.constant 0 : i32
    %c0_i32_1 = arith.constant 0 : i32
    %c0_i32_2 = arith.constant 0 : i32
    return %c0_i32, %c0_i32_0, %c0_i32_1 : i32, i32, i32
  }
  func.func @transform_1(%arg0: i32) -> (i32, i32, i32) {
    %c0_i32 = arith.constant 0 : i32
    %c0_i32_0 = arith.constant 0 : i32
    %c0_i32_1 = arith.constant 0 : i32
    %c0_i32_2 = arith.constant 0 : i32
    return %c0_i32, %c0_i32_0, %c0_i32_1 : i32, i32, i32
  }
  func.func @transform_2(%arg0: i32) -> (i32, i32) {
    %c0_i32 = arith.constant 0 : i32
    %c0_i32_0 = arith.constant 0 : i32
    %c0_i32_1 = arith.constant 0 : i32
    return %c0_i32, %c0_i32_0 : i32, i32
  }
  func.func @transform_3(%arg0: i32) -> (i32, i32) {
    %c0_i32 = arith.constant 0 : i32
    %c0_i32_0 = arith.constant 0 : i32
    %c0_i32_1 = arith.constant 0 : i32
    return %c0_i32, %c0_i32_0 : i32, i32
  }
  func.func @transform_4(%arg0: i32) -> (i32, i32, i32) {
    %c0_i32 = arith.constant 0 : i32
    %c0_i32_0 = arith.constant 0 : i32
    %c0_i32_1 = arith.constant 0 : i32
    %c0_i32_2 = arith.constant 0 : i32
    return %c0_i32, %c0_i32_0, %c0_i32_1 : i32, i32, i32
  }
  func.func @transform_5(%arg0: i32) -> (i32, i32) {
    %c0_i32 = arith.constant 0 : i32
    %c0_i32_0 = arith.constant 0 : i32
    %c0_i32_1 = arith.constant 0 : i32
    return %c0_i32, %c0_i32_0 : i32, i32
  }
  func.func @transform_6(%arg0: i32) -> (i32, i32) {
    %c0_i32 = arith.constant 0 : i32
    %c0_i32_0 = arith.constant 0 : i32
    %c0_i32_1 = arith.constant 0 : i32
    return %c0_i32, %c0_i32_0 : i32, i32
  }
  func.func @transform_7(%arg0: i32) -> (i32, i32, i32) {
    %c0_i32 = arith.constant 0 : i32
    %c0_i32_0 = arith.constant 0 : i32
    %c0_i32_1 = arith.constant 0 : i32
    %c0_i32_2 = arith.constant 0 : i32
    return %c0_i32, %c0_i32_0, %c0_i32_1 : i32, i32, i32
  }
}

</mosaic_0001>

<llo_original>
// kernel: tpu_custom_call.1
$region0: #{tpu_custom_call.1}
  #allocation0 [shape = 'u32[]', space=smem, size = 0x4, offset = 0x4, fixed_abs, tag = 'smem constant byte address 0x4 - core index']
  #allocation1 [shape = 'u32[72,128]{1,0:T(1,128)}', space=vmem, size = 0x9000, scoped, tag = 'internal scratch']
  %s0 = inlined_call_operand.vmem [shape: f32[2,18,144], index: 0, kind: input, shape index: {}]
  %s1 = inlined_call_operand.hbm [shape: f32[3,144,128], index: 1, kind: input, shape index: {}]
  %s2 = inlined_call_operand.vmem [shape: f32[1,128], index: 2, kind: input, shape index: {}]
  %s3 = inlined_call_operand.vmem [shape: f32[1,128], index: 3, kind: input, shape index: {}]
  %s4 = inlined_call_operand.hbm [shape: f32[3,144,128], index: 4, kind: input, shape index: {}]
  %s5 = inlined_call_operand.vmem [shape: f32[1,128], index: 5, kind: input, shape index: {}]
  %s6 = inlined_call_operand.vmem [shape: f32[1,128], index: 6, kind: input, shape index: {}]
  %s7 = inlined_call_operand.hbm [shape: f32[2,16,128], index: 7, kind: output, shape index: {}]
  %s8 = sld [smem:[#allocation0]]
  $region46: #{tpu_custom_call.1} parent=0
    _
  %s10 = ssub.s32 1, %s8
  %s11 = scalar_select 0, %s10, %s8
  $region1: #{tpu_custom_call.1} parent=0
    #allocation2 [shape = 'u8[221184]{0}', space=vmem, size = 0x36000, scoped, tag = 'input window, operand 1, single buffered']
    #allocation3 [shape = 's32[1]{0}', space=sflag, size = 0x4, scoped, tag = 'scoped memory for tpu_custom_call.1']
    #allocation4 [shape = 's32[1]{0}', space=sflag, size = 0x4, scoped, tag = 'scoped memory for tpu_custom_call.1']
    #allocation5 [shape = 'u8[221184]{0}', space=vmem, size = 0x36000, scoped, tag = 'input window, operand 4, single buffered']
    #allocation6 [shape = 's32[1]{0}', space=sflag, size = 0x4, scoped, tag = 'scoped memory for tpu_custom_call.1']
    #allocation7 [shape = 'u8[16384]{0}', space=vmem, size = 0x4000, scoped, tag = 'output window, operand 0, single buffered']
    %12 = vsyncpa [#allocation3], 0
    %13 = vsyncpa [#allocation6], 0
    %14 = vsyncpa [#allocation4], 0
    // Predicated region
    $region2: #{tpu_custom_call.1} parent=1 // pred_check
      _
    $region3: #{tpu_custom_call.1} parent=1 // pred_check_branch
      %16 = sbr.rel (0) target = $region5
    $region4: #{tpu_custom_call.1} parent=1 // pred_region
      _
    $region5: #{tpu_custom_call.1} parent=1 // pred_fallthru
      _
    // Predicated region
    $region6: #{tpu_custom_call.1} parent=1 // pred_check
      _
    $region7: #{tpu_custom_call.1} parent=1 // pred_check_branch
      %18 = sbr.rel (0) target = $region9
    $region8: #{tpu_custom_call.1} parent=1 // pred_region
      %20 = vsyncadd [#allocation3], 0
      %s21 = sshll.u32 %s1, 4
      %s22 = int_to_ptr.hbm [resolvable:$true] %s21
      %s23 = sshll.u32 [#allocation2], 4
      %s24 = int_to_ptr.vmem [resolvable:$true] %s23
      %29 = dma.hbm_to_vmem [thread:$0]  %s22, 6912, %s24, [#allocation3], 128, 128, 8
    $region9: #{tpu_custom_call.1} parent=1 // pred_fallthru
      _
    // Predicated region
    $region10: #{tpu_custom_call.1} parent=1 // pred_check
      _
    $region11: #{tpu_custom_call.1} parent=1 // pred_check_branch
      %31 = sbr.rel (0) target = $region13
    $region12: #{tpu_custom_call.1} parent=1 // pred_region
      _
    $region13: #{tpu_custom_call.1} parent=1 // pred_fallthru
      _
    // Predicated region
    $region14: #{tpu_custom_call.1} parent=1 // pred_check
      _
    $region15: #{tpu_custom_call.1} parent=1 // pred_check_branch
      %33 = sbr.rel (0) target = $region17
    $region16: #{tpu_custom_call.1} parent=1 // pred_region
      _
    $region17: #{tpu_custom_call.1} parent=1 // pred_fallthru
      _
    // Predicated region
    $region18: #{tpu_custom_call.1} parent=1 // pred_check
      _
    $region19: #{tpu_custom_call.1} parent=1 // pred_check_branch
      %35 = sbr.rel (0) target = $region21
    $region20: #{tpu_custom_call.1} parent=1 // pred_region
      %37 = vsyncadd [#allocation6], 0
      %s38 = sshll.u32 %s4, 4
      %s39 = int_to_ptr.hbm [resolvable:$true] %s38
      %s40 = sshll.u32 [#allocation5], 4
      %s41 = int_to_ptr.vmem [resolvable:$true] %s40
      %46 = dma.hbm_to_vmem [thread:$0]  %s39, 6912, %s41, [#allocation6], 128, 128, 8
    $region21: #{tpu_custom_call.1} parent=1 // pred_fallthru
      _
    // Predicated region
    $region22: #{tpu_custom_call.1} parent=1 // pred_check
      _
    $region23: #{tpu_custom_call.1} parent=1 // pred_check_branch
      %48 = sbr.rel (0) target = $region25
    $region24: #{tpu_custom_call.1} parent=1 // pred_region
      _
    $region25: #{tpu_custom_call.1} parent=1 // pred_fallthru
      _
    // Predicated region
    $region26: #{tpu_custom_call.1} parent=1 // pred_check
      _
    $region27: #{tpu_custom_call.1} parent=1 // pred_check_branch
      %50 = sbr.rel (0) target = $region29
    $region28: #{tpu_custom_call.1} parent=1 // pred_region
      _
    $region29: #{tpu_custom_call.1} parent=1 // pred_fallthru
      _
    // Predicated region
    $region30: #{tpu_custom_call.1} parent=1 // pred_check
      _
    $region31: #{tpu_custom_call.1} parent=1 // pred_check_branch
      %52 = sbr.rel (0) target = $region33
    $region32: #{tpu_custom_call.1} parent=1 // pred_region
      %54 = dma.done [#allocation3], 6912
    $region33: #{tpu_custom_call.1} parent=1 // pred_fallthru
      _
    // Predicated region
    $region34: #{tpu_custom_call.1} parent=1 // pred_check
      _
    $region35: #{tpu_custom_call.1} parent=1 // pred_check_branch
      %56 = sbr.rel (0) target = $region37
    $region36: #{tpu_custom_call.1} parent=1 // pred_region
      %58 = dma.done [#allocation6], 6912
    $region37: #{tpu_custom_call.1} parent=1 // pred_fallthru
      _
    %v59 = vld [vmem:[%s0] sm:$0xff]
    %v60 = vld [vmem:[%s0 + $0x8] sm:$0xff]
    %v61 = vld [vmem:[%s0 + $0x10] sm:$0xff]
    %v62 = vld [vmem:[%s0 + $0x18] sm:$0xff]
    %v63 = vld [vmem:[%s0 + $0x20] sm:$0x3]
    %v64 = vld [vmem:[%s0 + $0x28] sm:$0x3]
    %v65 = vld [vmem:[%s0 + $0x30] sm:$0xff]
    %v66 = vld [vmem:[%s0 + $0x38] sm:$0xff]
    %v67 = vld [vmem:[%s0 + $0x40] sm:$0xff]
    %v68 = vld [vmem:[%s0 + $0x48] sm:$0xff]
    %v69 = vld [vmem:[%s0 + $0x50] sm:$0x3]
    %v70 = vld [vmem:[%s0 + $0x58] sm:$0x3]
    %v71 = vld [vmem:[#allocation2] sm:$0xff]
    %v72 = vld [vmem:[#allocation2 + $0x8] sm:$0xff]
    %v73 = vld [vmem:[#allocation2 + $0x10] sm:$0xff]
    %v74 = vld [vmem:[#allocation2 + $0x18] sm:$0xff]
    %v75 = vld [vmem:[#allocation2 + $0x20] sm:$0xff]
    %v76 = vld [vmem:[#allocation2 + $0x28] sm:$0xff]
    %v77 = vld [vmem:[#allocation2 + $0x30] sm:$0xff]
    %v78 = vld [vmem:[#allocation2 + $0x38] sm:$0xff]
    %v79 = vld [vmem:[#allocation2 + $0x40] sm:$0xff]
    %v80 = vld [vmem:[#allocation2 + $0x48] sm:$0xff]
    %v81 = vld [vmem:[#allocation2 + $0x50] sm:$0xff]
    %v82 = vld [vmem:[#allocation2 + $0x58] sm:$0xff]
    %v83 = vld [vmem:[#allocation2 + $0x60] sm:$0xff]
    %v84 = vld [vmem:[#allocation2 + $0x68] sm:$0xff]
    %v85 = vld [vmem:[#allocation2 + $0x70] sm:$0xff]
    %v86 = vld [vmem:[#allocation2 + $0x78] sm:$0xff]
    %v87 = vld [vmem:[#allocation2 + $0x80] sm:$0xff]
    %v88 = vld [vmem:[#allocation2 + $0x88] sm:$0xff]
    %vm101 = vcmask 1046528
    %v102 = vrot.slane %v59, 1
    %v103 = vrot.slane %v61, 1
    %v104 = vsel %vm101, %v102, %v103
    %v105 = vrot.slane %v60, 1
    %v106 = vrot.slane %v62, 1
    %v107 = vsel %vm101, %v105, %v106
    %v108 = vrot.slane %v63, 1
    %v109 = vsel %vm101, %v103, %v108
    %v110 = vrot.slane %v64, 1
    %v111 = vsel %vm101, %v106, %v110
    %v112 = vrot.slane %v65, 1
    %v113 = vrot.slane %v67, 1
    %v114 = vsel %vm101, %v112, %v113
    %v115 = vrot.slane %v66, 1
    %v116 = vrot.slane %v68, 1
    %v117 = vsel %vm101, %v115, %v116
    %v118 = vrot.slane %v69, 1
    %v119 = vsel %vm101, %v113, %v118
    %v120 = vrot.slane %v70, 1
    %v121 = vsel %vm101, %v116, %v120
    %s126 = scalar_lea.vmem [#allocation2], 144
    %v127 = vld [vmem:[%s126] sm:$0xff]
    %v128 = vld [vmem:[%s126 + $0x8] sm:$0xff]
    %v129 = vld [vmem:[%s126 + $0x10] sm:$0xff]
    %v130 = vld [vmem:[%s126 + $0x18] sm:$0xff]
    %v131 = vld [vmem:[%s126 + $0x20] sm:$0xff]
    %v132 = vld [vmem:[%s126 + $0x28] sm:$0xff]
    %v133 = vld [vmem:[%s126 + $0x30] sm:$0xff]
    %v134 = vld [vmem:[%s126 + $0x38] sm:$0xff]
    %v135 = vld [vmem:[%s126 + $0x40] sm:$0xff]
    %v136 = vld [vmem:[%s126 + $0x48] sm:$0xff]
    %v137 = vld [vmem:[%s126 + $0x50] sm:$0xff]
    %v138 = vld [vmem:[%s126 + $0x58] sm:$0xff]
    %v139 = vld [vmem:[%s126 + $0x60] sm:$0xff]
    %v140 = vld [vmem:[%s126 + $0x68] sm:$0xff]
    %v141 = vld [vmem:[%s126 + $0x70] sm:$0xff]
    %v142 = vld [vmem:[%s126 + $0x78] sm:$0xff]
    %v143 = vld [vmem:[%s126 + $0x80] sm:$0xff]
    %v144 = vld [vmem:[%s126 + $0x88] sm:$0xff]
    %vm145 = vcmask 130048
    %v146 = vsel %vm145, %v107, 0
    %v148 = vsel %vm145, %v111, 0
    %v150 = vsel %vm145, %v117, 0
    %v152 = vsel %vm145, %v121, 0
    %154 = vmatpush.msra.mxu0 %v142
    %155 = vmatpush.msra.mxu0 %v141
    %156 = vmatpush.msra.mxu0 %v140
    %157 = vmatpush.msra.mxu0 %v139
    %158 = vmatpush.msra.mxu0 %v138
    %159 = vmatpush.msra.mxu0 %v137
    %160 = vmatpush.msra.mxu0 %v136
    %161 = vmatpush.msra.mxu0 %v135
    %162 = vmatpush.msra.mxu0 %v134
    %163 = vmatpush.msra.mxu0 %v133
    %164 = vmatpush.msra.mxu0 %v132
    %165 = vmatpush.msra.mxu0 %v131
    %166 = vmatpush.msra.mxu0 %v130
    %167 = vmatpush.msra.mxu0 %v129
    %168 = vmatpush.msra.mxu0 %v128
    %169 = vmatpush.msra.mxu0 %v127
    %170 = vmatmul.f32.gmra.mxu0 %v104
    %v171 = vpop.f32.mrf.mxu0
    %v172 = vadd.f32 0.0, %v171
    %173 = vmatmul.f32.gmra.mxu0 %v109
    %v174 = vpop.f32.mrf.mxu0
    %v175 = vadd.f32 0.0, %v174
    %176 = vmatmul.f32.gmra.mxu0 %v114
    %v177 = vpop.f32.mrf.mxu0
    %v178 = vadd.f32 0.0, %v177
    %179 = vmatmul.f32.gmra.mxu0 %v119
    %v180 = vpop.f32.mrf.mxu0
    %v181 = vadd.f32 0.0, %v180
    %182 = vdwg.mxu0
    %183 = vmatpush.msra.mxu0 0.0
    %184 = vmatpush.msra.mxu0 0.0
    %185 = vmatpush.msra.mxu0 0.0
    %186 = vmatpush.msra.mxu0 0.0
    %187 = vmatpush.msra.mxu0 0.0
    %188 = vmatpush.msra.mxu0 0.0
    %189 = vmatpush.msra.mxu0 0.0
    %190 = vmatpush.msra.mxu0 0.0
    %191 = vmatpush.msra.mxu0 0.0
    %192 = vmatpush.msra.mxu0 0.0
    %193 = vmatpush.msra.mxu0 0.0
    %194 = vmatpush.msra.mxu0 0.0
    %195 = vmatpush.msra.mxu0 0.0
    %196 = vmatpush.msra.mxu0 0.0
    %197 = vmatpush.msra.mxu0 %v144
    %198 = vmatpush.msra.mxu0 %v143
    %199 = vmatmul.f32.gmra.mxu0 %v146
    %v200 = vpop.f32.mrf.mxu0
    %v201 = vadd.f32 %v172, %v200
    %202 = vmatmul.f32.gmra.mxu0 %v148
    %v203 = vpop.f32.mrf.mxu0
    %v204 = vadd.f32 %v175, %v203
    %205 = vmatmul.f32.gmra.mxu0 %v150
    %v206 = vpop.f32.mrf.mxu0
    %v207 = vadd.f32 %v178, %v206
    %208 = vmatmul.f32.gmra.mxu0 %v152
    %v209 = vpop.f32.mrf.mxu0
    %v210 = vadd.f32 %v181, %v209
    %211 = vdwg.mxu0
    %v212 = vsel %vm145, %v60, 0
    %v214 = vsel %vm145, %v62, 0
    %v216 = vsel %vm145, %v66, 0
    %v218 = vsel %vm145, %v68, 0
    %220 = vmatpush.msra.mxu0 %v86
    %221 = vmatpush.msra.mxu0 %v85
    %222 = vmatpush.msra.mxu0 %v84
    %223 = vmatpush.msra.mxu0 %v83
    %224 = vmatpush.msra.mxu0 %v82
    %225 = vmatpush.msra.mxu0 %v81
    %226 = vmatpush.msra.mxu0 %v80
    %227 = vmatpush.msra.mxu0 %v79
    %228 = vmatpush.msra.mxu0 %v78
    %229 = vmatpush.msra.mxu0 %v77
    %230 = vmatpush.msra.mxu0 %v76
    %231 = vmatpush.msra.mxu0 %v75
    %232 = vmatpush.msra.mxu0 %v74
    %233 = vmatpush.msra.mxu0 %v73
    %234 = vmatpush.msra.mxu0 %v72
    %235 = vmatpush.msra.mxu0 %v71
    %236 = vmatmul.f32.gmra.mxu0 %v59
    %v237 = vpop.f32.mrf.mxu0
    %v238 = vadd.f32 %v201, %v237
    %239 = vmatmul.f32.gmra.mxu0 %v61
    %v240 = vpop.f32.mrf.mxu0
    %v241 = vadd.f32 %v204, %v240
    %242 = vmatmul.f32.gmra.mxu0 %v65
    %v243 = vpop.f32.mrf.mxu0
    %v244 = vadd.f32 %v207, %v243
    %245 = vmatmul.f32.gmra.mxu0 %v67
    %v246 = vpop.f32.mrf.mxu0
    %v247 = vadd.f32 %v210, %v246
    %248 = vdwg.mxu0
    %249 = vmatpush.msra.mxu0 0.0
    %250 = vmatpush.msra.mxu0 0.0
    %251 = vmatpush.msra.mxu0 0.0
    %252 = vmatpush.msra.mxu0 0.0
    %253 = vmatpush.msra.mxu0 0.0
    %254 = vmatpush.msra.mxu0 0.0
    %255 = vmatpush.msra.mxu0 0.0
    %256 = vmatpush.msra.mxu0 0.0
    %257 = vmatpush.msra.mxu0 0.0
    %258 = vmatpush.msra.mxu0 0.0
    %259 = vmatpush.msra.mxu0 0.0
    %260 = vmatpush.msra.mxu0 0.0
    %261 = vmatpush.msra.mxu0 0.0
    %262 = vmatpush.msra.mxu0 0.0
    %263 = vmatpush.msra.mxu0 %v88
    %264 = vmatpush.msra.mxu0 %v87
    %265 = vmatmul.f32.gmra.mxu0 %v212
    %v266 = vpop.f32.mrf.mxu0
    %v267 = vadd.f32 %v238, %v266
    %268 = vmatmul.f32.gmra.mxu0 %v214
    %v269 = vpop.f32.mrf.mxu0
    %v270 = vadd.f32 %v241, %v269
    %271 = vmatmul.f32.gmra.mxu0 %v216
    %v272 = vpop.f32.mrf.mxu0
    %v273 = vadd.f32 %v244, %v272
    %274 = vmatmul.f32.gmra.mxu0 %v218
    %v275 = vpop.f32.mrf.mxu0
    %v276 = vadd.f32 %v247, %v275
    %277 = vdwg.mxu0
    %vm278 = vcmask 1045504
    %v279 = vrot.slane %v59, 2
    %v280 = vrot.slane %v61, 2
    %v281 = vsel %vm278, %v279, %v280
    %v282 = vrot.slane %v60, 2
    %v283 = vrot.slane %v62, 2
    %v284 = vsel %vm278, %v282, %v283
    %v285 = vrot.slane %v63, 2
    %v286 = vsel %vm278, %v280, %v285
    %v287 = vrot.slane %v64, 2
    %v288 = vsel %vm278, %v283, %v287
    %v289 = vrot.slane %v65, 2
    %v290 = vrot.slane %v67, 2
    %v291 = vsel %vm278, %v289, %v290
    %v292 = vrot.slane %v66, 2
    %v293 = vrot.slane %v68, 2
    %v294 = vsel %vm278, %v292, %v293
    %v295 = vrot.slane %v69, 2
    %v296 = vsel %vm278, %v290, %v295
    %v297 = vrot.slane %v70, 2
    %v298 = vsel %vm278, %v293, %v297
    %s303 = scalar_lea.vmem [#allocation2], 288
    %v304 = vld [vmem:[%s303] sm:$0xff]
    %v305 = vld [vmem:[%s303 + $0x8] sm:$0xff]
    %v306 = vld [vmem:[%s303 + $0x10] sm:$0xff]
    %v307 = vld [vmem:[%s303 + $0x18] sm:$0xff]
    %v308 = vld [vmem:[%s303 + $0x20] sm:$0xff]
    %v309 = vld [vmem:[%s303 + $0x28] sm:$0xff]
    %v310 = vld [vmem:[%s303 + $0x30] sm:$0xff]
    %v311 = vld [vmem:[%s303 + $0x38] sm:$0xff]
    %v312 = vld [vmem:[%s303 + $0x40] sm:$0xff]
    %v313 = vld [vmem:[%s303 + $0x48] sm:$0xff]
    %v314 = vld [vmem:[%s303 + $0x50] sm:$0xff]
    %v315 = vld [vmem:[%s303 + $0x58] sm:$0xff]
    %v316 = vld [vmem:[%s303 + $0x60] sm:$0xff]
    %v317 = vld [vmem:[%s303 + $0x68] sm:$0xff]
    %v318 = vld [vmem:[%s303 + $0x70] sm:$0xff]
    %v319 = vld [vmem:[%s303 + $0x78] sm:$0xff]
    %v320 = vld [vmem:[%s303 + $0x80] sm:$0xff]
    %v321 = vld [vmem:[%s303 + $0x88] sm:$0xff]
    %v322 = vsel %vm145, %v284, 0
    %v324 = vsel %vm145, %v288, 0
    %v326 = vsel %vm145, %v294, 0
    %v328 = vsel %vm145, %v298, 0
    %330 = vmatpush.msra.mxu0 %v319
    %331 = vmatpush.msra.mxu0 %v318
    %332 = vmatpush.msra.mxu0 %v317
    %333 = vmatpush.msra.mxu0 %v316
    %334 = vmatpush.msra.mxu0 %v315
    %335 = vmatpush.msra.mxu0 %v314
    %336 = vmatpush.msra.mxu0 %v313
    %337 = vmatpush.msra.mxu0 %v312
    %338 = vmatpush.msra.mxu0 %v311
    %339 = vmatpush.msra.mxu0 %v310
    %340 = vmatpush.msra.mxu0 %v309
    %341 = vmatpush.msra.mxu0 %v308
    %342 = vmatpush.msra.mxu0 %v307
    %343 = vmatpush.msra.mxu0 %v306
    %344 = vmatpush.msra.mxu0 %v305
    %345 = vmatpush.msra.mxu0 %v304
    %346 = vmatmul.f32.gmra.mxu0 %v281
    %v347 = vpop.f32.mrf.mxu0
    %v348 = vadd.f32 0.0, %v347
    %349 = vmatmul.f32.gmra.mxu0 %v286
    %v350 = vpop.f32.mrf.mxu0
    %v351 = vadd.f32 0.0, %v350
    %352 = vmatmul.f32.gmra.mxu0 %v291
    %v353 = vpop.f32.mrf.mxu0
    %v354 = vadd.f32 0.0, %v353
    %355 = vmatmul.f32.gmra.mxu0 %v296
    %v356 = vpop.f32.mrf.mxu0
    %v357 = vadd.f32 0.0, %v356
    %358 = vdwg.mxu0
    %359 = vmatpush.msra.mxu0 0.0
    %360 = vmatpush.msra.mxu0 0.0
    %361 = vmatpush.msra.mxu0 0.0
    %362 = vmatpush.msra.mxu0 0.0
    %363 = vmatpush.msra.mxu0 0.0
    %364 = vmatpush.msra.mxu0 0.0
    %365 = vmatpush.msra.mxu0 0.0
    %366 = vmatpush.msra.mxu0 0.0
    %367 = vmatpush.msra.mxu0 0.0
    %368 = vmatpush.msra.mxu0 0.0
    %369 = vmatpush.msra.mxu0 0.0
    %370 = vmatpush.msra.mxu0 0.0
    %371 = vmatpush.msra.mxu0 0.0
    %372 = vmatpush.msra.mxu0 0.0
    %373 = vmatpush.msra.mxu0 %v321
    %374 = vmatpush.msra.mxu0 %v320
    %375 = vmatmul.f32.gmra.mxu0 %v322
    %v376 = vpop.f32.mrf.mxu0
    %v377 = vadd.f32 %v348, %v376
    %378 = vmatmul.f32.gmra.mxu0 %v324
    %v379 = vpop.f32.mrf.mxu0
    %v380 = vadd.f32 %v351, %v379
    %381 = vmatmul.f32.gmra.mxu0 %v326
    %v382 = vpop.f32.mrf.mxu0
    %v383 = vadd.f32 %v354, %v382
    %384 = vmatmul.f32.gmra.mxu0 %v328
    %v385 = vpop.f32.mrf.mxu0
    %v386 = vadd.f32 %v357, %v385
    %387 = vdwg.mxu0
    %v388 = vadd.f32 %v267, %v377
    %v389 = vadd.f32 %v270, %v380
    %v390 = vadd.f32 %v273, %v383
    %v391 = vadd.f32 %v276, %v386
    %v392 = vld [vmem:[%s2] sm:$0x1]
    %v394 = vperm.slane %v392, 0
    %v396 = vmul.f32 %v388, %v394
    %v397 = vmul.f32 %v389, %v394
    %v398 = vmul.f32 %v390, %v394
    %v399 = vmul.f32 %v391, %v394
    %v400 = vld [vmem:[%s3] sm:$0x1]
    %v402 = vperm.slane %v400, 0
    %v404 = vadd.f32 %v396, %v402
    %v405 = vadd.f32 %v397, %v402
    %v406 = vadd.f32 %v398, %v402
    %v407 = vadd.f32 %v399, %v402
    %v408 = vmax.f32 %v404, 0.0
    %v409 = vmax.f32 %v405, 0.0
    %v410 = vmax.f32 %v406, 0.0
    %v411 = vmax.f32 %v407, 0.0
    %416 = vrot.lane.b32.xlu0 %v408, 8
    %v417 = vpop.permute.xlu0 %416
    %418 = vrot.lane.b32.xlu0 %v409, 8
    %v419 = vpop.permute.xlu0 %418
    %420 = vrot.lane.b32.xlu0 %v410, 8
    %v421 = vpop.permute.xlu0 %420
    %422 = vrot.lane.b32.xlu0 %v411, 8
    %v423 = vpop.permute.xlu0 %422
    %vm428 = vcmask 64512
    %v429 = vsel %vm428, 0.0, %v417
    %v430 = vsel %vm428, 0.0, %v419
    %v431 = vsel %vm428, 0.0, %v421
    %v432 = vsel %vm428, 0.0, %v423
    %v433 = vsel %vm428, %v417, 0.0
    %v434 = vsel %vm428, %v419, 0.0
    %v435 = vsel %vm428, %v421, 0.0
    %v436 = vsel %vm428, %v423, 0.0
    %vm445 = vcmask 1040384
    %v446 = vrot.slane %v429, 7
    %v447 = vrot.slane %v433, 7
    %v448 = vrot.slane %v430, 7
    %v449 = vsel %vm445, %v446, %v448
    %v450 = vrot.slane %v434, 7
    %v451 = vsel %vm445, %v447, %v450
    %v452 = vrot.slane %v431, 7
    %v453 = vrot.slane %v435, 7
    %v454 = vrot.slane %v432, 7
    %v455 = vsel %vm445, %v452, %v454
    %v456 = vrot.slane %v436, 7
    %v457 = vsel %vm445, %v453, %v456
    %v468 = vsel %vm445, 0.0, %v446
    %v469 = vsel %vm445, 0.0, %v447
    %v470 = vsel %vm445, 0.0, %v452
    %v471 = vsel %vm445, 0.0, %v453
    %v472 = vsel %vm445, %v448, 0.0
    %v473 = vsel %vm445, %v450, 0.0
    %v474 = vsel %vm445, %v454, 0.0
    %v475 = vsel %vm445, %v456, 0.0
    %v476 = vld [vmem:[#allocation5] sm:$0xff]
    %v477 = vld [vmem:[#allocation5 + $0x8] sm:$0xff]
    %v478 = vld [vmem:[#allocation5 + $0x10] sm:$0xff]
    %v479 = vld [vmem:[#allocation5 + $0x18] sm:$0xff]
    %v480 = vld [vmem:[#allocation5 + $0x20] sm:$0xff]
    %v481 = vld [vmem:[#allocation5 + $0x28] sm:$0xff]
    %v482 = vld [vmem:[#allocation5 + $0x30] sm:$0xff]
    %v483 = vld [vmem:[#allocation5 + $0x38] sm:$0xff]
    %v484 = vld [vmem:[#allocation5 + $0x40] sm:$0xff]
    %v485 = vld [vmem:[#allocation5 + $0x48] sm:$0xff]
    %v486 = vld [vmem:[#allocation5 + $0x50] sm:$0xff]
    %v487 = vld [vmem:[#allocation5 + $0x58] sm:$0xff]
    %v488 = vld [vmem:[#allocation5 + $0x60] sm:$0xff]
    %v489 = vld [vmem:[#allocation5 + $0x68] sm:$0xff]
    %v490 = vld [vmem:[#allocation5 + $0x70] sm:$0xff]
    %v491 = vld [vmem:[#allocation5 + $0x78] sm:$0xff]
    %v492 = vld [vmem:[#allocation5 + $0x80] sm:$0xff]
    %v493 = vld [vmem:[#allocation5 + $0x88] sm:$0xff]
    %v502 = vrot.slane %v468, 1
    %v503 = vrot.slane %v449, 1
    %v504 = vsel %vm101, %v502, %v503
    %v505 = vrot.slane %v469, 1
    %v506 = vrot.slane %v451, 1
    %v507 = vsel %vm101, %v505, %v506
    %v508 = vrot.slane %v472, 1
    %v509 = vsel %vm101, %v503, %v508
    %v510 = vrot.slane %v473, 1
    %v511 = vsel %vm101, %v506, %v510
    %v512 = vrot.slane %v470, 1
    %v513 = vrot.slane %v455, 1
    %v514 = vsel %vm101, %v512, %v513
    %v515 = vrot.slane %v471, 1
    %v516 = vrot.slane %v457, 1
    %v517 = vsel %vm101, %v515, %v516
    %v518 = vrot.slane %v474, 1
    %v519 = vsel %vm101, %v513, %v518
    %v520 = vrot.slane %v475, 1
    %v521 = vsel %vm101, %v516, %v520
    %s526 = scalar_lea.vmem [#allocation5], 144
    %v527 = vld [vmem:[%s526] sm:$0xff]
    %v528 = vld [vmem:[%s526 + $0x8] sm:$0xff]
    %v529 = vld [vmem:[%s526 + $0x10] sm:$0xff]
    %v530 = vld [vmem:[%s526 + $0x18] sm:$0xff]
    %v531 = vld [vmem:[%s526 + $0x20] sm:$0xff]
    %v532 = vld [vmem:[%s526 + $0x28] sm:$0xff]
    %v533 = vld [vmem:[%s526 + $0x30] sm:$0xff]
    %v534 = vld [vmem:[%s526 + $0x38] sm:$0xff]
    %v535 = vld [vmem:[%s526 + $0x40] sm:$0xff]
    %v536 = vld [vmem:[%s526 + $0x48] sm:$0xff]
    %v537 = vld [vmem:[%s526 + $0x50] sm:$0xff]
    %v538 = vld [vmem:[%s526 + $0x58] sm:$0xff]
    %v539 = vld [vmem:[%s526 + $0x60] sm:$0xff]
    %v540 = vld [vmem:[%s526 + $0x68] sm:$0xff]
    %v541 = vld [vmem:[%s526 + $0x70] sm:$0xff]
    %v542 = vld [vmem:[%s526 + $0x78] sm:$0xff]
    %v543 = vld [vmem:[%s526 + $0x80] sm:$0xff]
    %v544 = vld [vmem:[%s526 + $0x88] sm:$0xff]
    %v545 = vsel %vm145, %v507, 0
    %v547 = vsel %vm145, %v511, 0
    %v549 = vsel %vm145, %v517, 0
    %v551 = vsel %vm145, %v521, 0
    %553 = vmatpush.msra.mxu0 %v542
    %554 = vmatpush.msra.mxu0 %v541
    %555 = vmatpush.msra.mxu0 %v540
    %556 = vmatpush.msra.mxu0 %v539
    %557 = vmatpush.msra.mxu0 %v538
    %558 = vmatpush.msra.mxu0 %v537
    %559 = vmatpush.msra.mxu0 %v536
    %560 = vmatpush.msra.mxu0 %v535
    %561 = vmatpush.msra.mxu0 %v534
    %562 = vmatpush.msra.mxu0 %v533
    %563 = vmatpush.msra.mxu0 %v532
    %564 = vmatpush.msra.mxu0 %v531
    %565 = vmatpush.msra.mxu0 %v530
    %566 = vmatpush.msra.mxu0 %v529
    %567 = vmatpush.msra.mxu0 %v528
    %568 = vmatpush.msra.mxu0 %v527
    %569 = vmatmul.f32.gmra.mxu0 %v504
    %v570 = vpop.f32.mrf.mxu0
    %v571 = vadd.f32 0.0, %v570
    %572 = vmatmul.f32.gmra.mxu0 %v509
    %v573 = vpop.f32.mrf.mxu0
    %v574 = vadd.f32 0.0, %v573
    %575 = vmatmul.f32.gmra.mxu0 %v514
    %v576 = vpop.f32.mrf.mxu0
    %v577 = vadd.f32 0.0, %v576
    %578 = vmatmul.f32.gmra.mxu0 %v519
    %v579 = vpop.f32.mrf.mxu0
    %v580 = vadd.f32 0.0, %v579
    %581 = vdwg.mxu0
    %582 = vmatpush.msra.mxu0 0.0
    %583 = vmatpush.msra.mxu0 0.0
    %584 = vmatpush.msra.mxu0 0.0
    %585 = vmatpush.msra.mxu0 0.0
    %586 = vmatpush.msra.mxu0 0.0
    %587 = vmatpush.msra.mxu0 0.0
    %588 = vmatpush.msra.mxu0 0.0
    %589 = vmatpush.msra.mxu0 0.0
    %590 = vmatpush.msra.mxu0 0.0
    %591 = vmatpush.msra.mxu0 0.0
    %592 = vmatpush.msra.mxu0 0.0
    %593 = vmatpush.msra.mxu0 0.0
    %594 = vmatpush.msra.mxu0 0.0
    %595 = vmatpush.msra.mxu0 0.0
    %596 = vmatpush.msra.mxu0 %v544
    %597 = vmatpush.msra.mxu0 %v543
    %598 = vmatmul.f32.gmra.mxu0 %v545
    %v599 = vpop.f32.mrf.mxu0
    %v600 = vadd.f32 %v571, %v599
    %601 = vmatmul.f32.gmra.mxu0 %v547
    %v602 = vpop.f32.mrf.mxu0
    %v603 = vadd.f32 %v574, %v602
    %604 = vmatmul.f32.gmra.mxu0 %v549
    %v605 = vpop.f32.mrf.mxu0
    %v606 = vadd.f32 %v577, %v605
    %607 = vmatmul.f32.gmra.mxu0 %v551
    %v608 = vpop.f32.mrf.mxu0
    %v609 = vadd.f32 %v580, %v608
    %610 = vdwg.mxu0
    %v611 = vsel %vm145, %v469, 0
    %v613 = vsel %vm145, %v451, 0
    %v615 = vsel %vm145, %v471, 0
    %v617 = vsel %vm145, %v457, 0
    %619 = vmatpush.msra.mxu0 %v491
    %620 = vmatpush.msra.mxu0 %v490
    %621 = vmatpush.msra.mxu0 %v489
    %622 = vmatpush.msra.mxu0 %v488
    %623 = vmatpush.msra.mxu0 %v487
    %624 = vmatpush.msra.mxu0 %v486
    %625 = vmatpush.msra.mxu0 %v485
    %626 = vmatpush.msra.mxu0 %v484
    %627 = vmatpush.msra.mxu0 %v483
    %628 = vmatpush.msra.mxu0 %v482
    %629 = vmatpush.msra.mxu0 %v481
    %630 = vmatpush.msra.mxu0 %v480
    %631 = vmatpush.msra.mxu0 %v479
    %632 = vmatpush.msra.mxu0 %v478
    %633 = vmatpush.msra.mxu0 %v477
    %634 = vmatpush.msra.mxu0 %v476
    %635 = vmatmul.f32.gmra.mxu0 %v468
    %v636 = vpop.f32.mrf.mxu0
    %v637 = vadd.f32 %v600, %v636
    %638 = vmatmul.f32.gmra.mxu0 %v449
    %v639 = vpop.f32.mrf.mxu0
    %v640 = vadd.f32 %v603, %v639
    %641 = vmatmul.f32.gmra.mxu0 %v470
    %v642 = vpop.f32.mrf.mxu0
    %v643 = vadd.f32 %v606, %v642
    %644 = vmatmul.f32.gmra.mxu0 %v455
    %v645 = vpop.f32.mrf.mxu0
    %v646 = vadd.f32 %v609, %v645
    %647 = vdwg.mxu0
    %648 = vmatpush.msra.mxu0 0.0
    %649 = vmatpush.msra.mxu0 0.0
    %650 = vmatpush.msra.mxu0 0.0
    %651 = vmatpush.msra.mxu0 0.0
    %652 = vmatpush.msra.mxu0 0.0
    %653 = vmatpush.msra.mxu0 0.0
    %654 = vmatpush.msra.mxu0 0.0
    %655 = vmatpush.msra.mxu0 0.0
    %656 = vmatpush.msra.mxu0 0.0
    %657 = vmatpush.msra.mxu0 0.0
    %658 = vmatpush.msra.mxu0 0.0
    %659 = vmatpush.msra.mxu0 0.0
    %660 = vmatpush.msra.mxu0 0.0
    %661 = vmatpush.msra.mxu0 0.0
    %662 = vmatpush.msra.mxu0 %v493
    %663 = vmatpush.msra.mxu0 %v492
    %664 = vmatmul.f32.gmra.mxu0 %v611
    %v665 = vpop.f32.mrf.mxu0
    %v666 = vadd.f32 %v637, %v665
    %667 = vmatmul.f32.gmra.mxu0 %v613
    %v668 = vpop.f32.mrf.mxu0
    %v669 = vadd.f32 %v640, %v668
    %670 = vmatmul.f32.gmra.mxu0 %v615
    %v671 = vpop.f32.mrf.mxu0
    %v672 = vadd.f32 %v643, %v671
    %673 = vmatmul.f32.gmra.mxu0 %v617
    %v674 = vpop.f32.mrf.mxu0
    %v675 = vadd.f32 %v646, %v674
    %676 = vdwg.mxu0
    %v677 = vrot.slane %v468, 2
    %v678 = vrot.slane %v449, 2
    %v679 = vsel %vm278, %v677, %v678
    %v680 = vrot.slane %v469, 2
    %v681 = vrot.slane %v451, 2
    %v682 = vsel %vm278, %v680, %v681
    %v683 = vrot.slane %v472, 2
    %v684 = vsel %vm278, %v678, %v683
    %v685 = vrot.slane %v473, 2
    %v686 = vsel %vm278, %v681, %v685
    %v687 = vrot.slane %v470, 2
    %v688 = vrot.slane %v455, 2
    %v689 = vsel %vm278, %v687, %v688
    %v690 = vrot.slane %v471, 2
    %v691 = vrot.slane %v457, 2
    %v692 = vsel %vm278, %v690, %v691
    %v693 = vrot.slane %v474, 2
    %v694 = vsel %vm278, %v688, %v693
    %v695 = vrot.slane %v475, 2
    %v696 = vsel %vm278, %v691, %v695
    %s701 = scalar_lea.vmem [#allocation5], 288
    %v702 = vld [vmem:[%s701] sm:$0xff]
    %v703 = vld [vmem:[%s701 + $0x8] sm:$0xff]
    %v704 = vld [vmem:[%s701 + $0x10] sm:$0xff]
    %v705 = vld [vmem:[%s701 + $0x18] sm:$0xff]
    %v706 = vld [vmem:[%s701 + $0x20] sm:$0xff]
    %v707 = vld [vmem:[%s701 + $0x28] sm:$0xff]
    %v708 = vld [vmem:[%s701 + $0x30] sm:$0xff]
    %v709 = vld [vmem:[%s701 + $0x38] sm:$0xff]
    %v710 = vld [vmem:[%s701 + $0x40] sm:$0xff]
    %v711 = vld [vmem:[%s701 + $0x48] sm:$0xff]
    %v712 = vld [vmem:[%s701 + $0x50] sm:$0xff]
    %v713 = vld [vmem:[%s701 + $0x58] sm:$0xff]
    %v714 = vld [vmem:[%s701 + $0x60] sm:$0xff]
    %v715 = vld [vmem:[%s701 + $0x68] sm:$0xff]
    %v716 = vld [vmem:[%s701 + $0x70] sm:$0xff]
    %v717 = vld [vmem:[%s701 + $0x78] sm:$0xff]
    %v718 = vld [vmem:[%s701 + $0x80] sm:$0xff]
    %v719 = vld [vmem:[%s701 + $0x88] sm:$0xff]
    %v720 = vsel %vm145, %v682, 0
    %v722 = vsel %vm145, %v686, 0
    %v724 = vsel %vm145, %v692, 0
    %v726 = vsel %vm145, %v696, 0
    %728 = vmatpush.msra.mxu0 %v717
    %729 = vmatpush.msra.mxu0 %v716
    %730 = vmatpush.msra.mxu0 %v715
    %731 = vmatpush.msra.mxu0 %v714
    %732 = vmatpush.msra.mxu0 %v713
    %733 = vmatpush.msra.mxu0 %v712
    %734 = vmatpush.msra.mxu0 %v711
    %735 = vmatpush.msra.mxu0 %v710
    %736 = vmatpush.msra.mxu0 %v709
    %737 = vmatpush.msra.mxu0 %v708
    %738 = vmatpush.msra.mxu0 %v707
    %739 = vmatpush.msra.mxu0 %v706
    %740 = vmatpush.msra.mxu0 %v705
    %741 = vmatpush.msra.mxu0 %v704
    %742 = vmatpush.msra.mxu0 %v703
    %743 = vmatpush.msra.mxu0 %v702
    %744 = vmatmul.f32.gmra.mxu0 %v679
    %v745 = vpop.f32.mrf.mxu0
    %v746 = vadd.f32 0.0, %v745
    %747 = vmatmul.f32.gmra.mxu0 %v684
    %v748 = vpop.f32.mrf.mxu0
    %v749 = vadd.f32 0.0, %v748
    %750 = vmatmul.f32.gmra.mxu0 %v689
    %v751 = vpop.f32.mrf.mxu0
    %v752 = vadd.f32 0.0, %v751
    %753 = vmatmul.f32.gmra.mxu0 %v694
    %v754 = vpop.f32.mrf.mxu0
    %v755 = vadd.f32 0.0, %v754
    %756 = vdwg.mxu0
    %757 = vmatpush.msra.mxu0 0.0
    %758 = vmatpush.msra.mxu0 0.0
    %759 = vmatpush.msra.mxu0 0.0
    %760 = vmatpush.msra.mxu0 0.0
    %761 = vmatpush.msra.mxu0 0.0
    %762 = vmatpush.msra.mxu0 0.0
    %763 = vmatpush.msra.mxu0 0.0
    %764 = vmatpush.msra.mxu0 0.0
    %765 = vmatpush.msra.mxu0 0.0
    %766 = vmatpush.msra.mxu0 0.0
    %767 = vmatpush.msra.mxu0 0.0
    %768 = vmatpush.msra.mxu0 0.0
    %769 = vmatpush.msra.mxu0 0.0
    %770 = vmatpush.msra.mxu0 0.0
    %771 = vmatpush.msra.mxu0 %v719
    %772 = vmatpush.msra.mxu0 %v718
    %773 = vmatmul.f32.gmra.mxu0 %v720
    %v774 = vpop.f32.mrf.mxu0
    %v775 = vadd.f32 %v746, %v774
    %776 = vmatmul.f32.gmra.mxu0 %v722
    %v777 = vpop.f32.mrf.mxu0
    %v778 = vadd.f32 %v749, %v777
    %779 = vmatmul.f32.gmra.mxu0 %v724
    %v780 = vpop.f32.mrf.mxu0
    %v781 = vadd.f32 %v752, %v780
    %782 = vmatmul.f32.gmra.mxu0 %v726
    %v783 = vpop.f32.mrf.mxu0
    %v784 = vadd.f32 %v755, %v783
    %785 = vdwg.mxu0
    %v786 = vadd.f32 %v666, %v775
    %v787 = vadd.f32 %v669, %v778
    %v788 = vadd.f32 %v672, %v781
    %v789 = vadd.f32 %v675, %v784
    %v790 = vld [vmem:[%s5] sm:$0x1]
    %v792 = vperm.slane %v790, 0
    %v794 = vmul.f32 %v786, %v792
    %v795 = vmul.f32 %v787, %v792
    %v796 = vmul.f32 %v788, %v792
    %v797 = vmul.f32 %v789, %v792
    %v798 = vld [vmem:[%s6] sm:$0x1]
    %v800 = vperm.slane %v798, 0
    %v802 = vadd.f32 %v794, %v800
    %v803 = vadd.f32 %v795, %v800
    %v804 = vadd.f32 %v796, %v800
    %v805 = vadd.f32 %v797, %v800
    %806 = vrot.lane.b32.xlu0 %v104, 120
    %v807 = vpop.permute.xlu0 %806
    %808 = vrot.lane.b32.xlu0 %v107, 120
    %v809 = vpop.permute.xlu0 %808
    %810 = vrot.lane.b32.xlu0 %v109, 120
    %v811 = vpop.permute.xlu0 %810
    %812 = vrot.lane.b32.xlu0 %v111, 120
    %v813 = vpop.permute.xlu0 %812
    %814 = vrot.lane.b32.xlu0 %v114, 120
    %v815 = vpop.permute.xlu0 %814
    %816 = vrot.lane.b32.xlu0 %v117, 120
    %v817 = vpop.permute.xlu0 %816
    %818 = vrot.lane.b32.xlu0 %v119, 120
    %v819 = vpop.permute.xlu0 %818
    %820 = vrot.lane.b32.xlu0 %v121, 120
    %v821 = vpop.permute.xlu0 %820
    %vm822 = vcmask 982016
    %v823 = vsel %vm822, %v807, %v809
    %v824 = vsel %vm822, %v811, %v813
    %v825 = vsel %vm822, %v815, %v817
    %v826 = vsel %vm822, %v819, %v821
    %v831 = vadd.f32 %v802, %v823
    %v832 = vadd.f32 %v803, %v824
    %v833 = vadd.f32 %v804, %v825
    %v834 = vadd.f32 %v805, %v826
    %v835 = vmax.f32 %v831, 0.0
    %v836 = vmax.f32 %v832, 0.0
    %v837 = vmax.f32 %v833, 0.0
    %v838 = vmax.f32 %v834, 0.0
    %839 = vst [vmem:[#allocation7] sm:$0xff] %v835
    %840 = vst [vmem:[#allocation7 + $0x8] sm:$0xff] %v836
    %841 = vst [vmem:[#allocation7 + $0x10] sm:$0xff] %v837
    %842 = vst [vmem:[#allocation7 + $0x18] sm:$0xff] %v838
    // Predicated region
    $region38: #{tpu_custom_call.1} parent=1 // pred_check
      _
    $region39: #{tpu_custom_call.1} parent=1 // pred_check_branch
      %844 = sbr.rel (0) target = $region41
    $region40: #{tpu_custom_call.1} parent=1 // pred_region
      %846 = vsyncadd [#allocation4], 0
      %s847 = sshll.u32 [#allocation7], 4
      %s848 = int_to_ptr.vmem [resolvable:$true] %s847
      %s849 = sshll.u32 %s7, 4
      %s850 = int_to_ptr.hbm [resolvable:$true] %s849
      %855 = dma.vmem_to_hbm [thread:$0]  %s848, 512, %s850, [#allocation4], 128, 128, 8
    $region41: #{tpu_custom_call.1} parent=1 // pred_fallthru
      _
    // Predicated region
    $region42: #{tpu_custom_call.1} parent=1 // pred_check
      _
    $region43: #{tpu_custom_call.1} parent=1 // pred_check_branch
      %857 = sbr.rel (0) target = $region45
    $region44: #{tpu_custom_call.1} parent=1 // pred_region
      %859 = dma.done [#allocation4], 512
    $region45: #{tpu_custom_call.1} parent=1 // pred_fallthru
      _
    %860 = vsyncpa [#allocation3], 1
    %861 = vsyncpa [#allocation6], 1
    %862 = vsyncpa [#allocation4], 1

</llo_original>
